<compile_context>
chip_gen: v7x
topology: tpu7x:2x2x1
jax: 0.10.0
libtpu: 0.0.40
codegen_flags: <defaults>
</compile_context>

<pallas_src>
import functools

import jax
import jax.numpy as jnp
from jax.experimental import pallas as pl
from jax.experimental.pallas import tpu as pltpu

LANE = 128  # TPU lane width; padded feature / hidden / output dimension


def _round_up(x, m):
    return ((x + m - 1) // m) * m


def toy_mlp_kernel(x_ref, w1_ref, w2_ref, o_ref):
    # Biases are pre-folded into w1/w2 via the augmented "ones" lane, so the body is
    # just: (x @ W1) -> ReLU -> (h @ W2). The MXU accumulates in f32.
    h = jnp.dot(x_ref[...], w1_ref[...], preferred_element_type=jnp.float32)
    h = jnp.maximum(h, 0.0)
    y = jnp.dot(h, w2_ref[...], preferred_element_type=jnp.float32)
    o_ref[...] = y.astype(o_ref.dtype)


@functools.partial(jax.jit, static_argnames=("block_rows",))
def toy_model_forward(x, w1, b1, w2, b2, *, block_rows=256):
    """x: [B, 10] -> [B, 5].  Matches PyTorch net2(relu(net1(x))).

    Weights are stored as [in, out] (transposed relative to PyTorch's [out, in]);
    biases are 1-D vectors.
    """
    dtype = x.dtype
    B, f_in = x.shape
    h_dim = w1.shape[1]
    out_dim = w2.shape[1]

    # ---- Pad to a lane-dense (128-wide) layout and fold biases into the weights. ----
    # x_pad carries the real features in lanes [0, f_in) and a constant 1.0 in lane
    # f_in.  W1_pad routes that ones-lane through layer 1 (adding b1 and re-emitting a
    # ones-lane at hidden index h_dim, which ReLU leaves untouched), and W2_pad uses
    # the re-emitted ones-lane to add b2.
    w1_pad = jnp.zeros((LANE, LANE), dtype)
    w1_pad = w1_pad.at[:f_in, :h_dim].set(w1.astype(dtype))
    w1_pad = w1_pad.at[f_in, :h_dim].set(b1.reshape(-1).astype(dtype))
    w1_pad = w1_pad.at[f_in, h_dim].set(jnp.asarray(1.0, dtype))  # carry ones-lane

    w2_pad = jnp.zeros((LANE, LANE), dtype)
    w2_pad = w2_pad.at[:h_dim, :out_dim].set(w2.astype(dtype))
    w2_pad = w2_pad.at[h_dim, :out_dim].set(b2.reshape(-1).astype(dtype))

    # ---- Batch tiling: row tiles are multiples of 8 sublanes; batch padded to tile. ----
    tb = min(block_rows, _round_up(B, 8))
    b_pad = _round_up(B, tb)

    x_pad = jnp.zeros((b_pad, LANE), dtype)
    x_pad = x_pad.at[:B, :f_in].set(x)
    x_pad = x_pad.at[:B, f_in].set(jnp.asarray(1.0, dtype))

    grid = (b_pad // tb,)

    flops = 2 * 2 * b_pad * LANE * LANE  # two matmuls
    bytes_accessed = 4 * (2 * b_pad * LANE + 2 * LANE * LANE)

    y_pad = pl.pallas_call(
        toy_mlp_kernel,
        out_shape=jax.ShapeDtypeStruct((b_pad, LANE), dtype),
        grid=grid,
        in_specs=[
            pl.BlockSpec((tb, LANE), lambda i: (i, 0)),    # x tile streams per step
            pl.BlockSpec((LANE, LANE), lambda i: (0, 0)),  # W1 resident in VMEM
            pl.BlockSpec((LANE, LANE), lambda i: (0, 0)),  # W2 resident in VMEM
        ],
        out_specs=pl.BlockSpec((tb, LANE), lambda i: (i, 0)),
        compiler_params=pltpu.CompilerParams(
            dimension_semantics=("parallel",),
        ),
        cost_estimate=pl.CostEstimate(
            flops=flops, transcendentals=0, bytes_accessed=bytes_accessed
        ),
    )(x_pad, w1_pad, w2_pad)

    return y_pad[:B, :out_dim]


def init_params(key):
    """Deterministic init mimicking nn.Linear default (uniform +-1/sqrt(fan_in))."""
    k1, k2, k3, k4 = jax.random.split(key, 4)
    in1, h, out = 10, 10, 5
    bound1 = 1.0 / jnp.sqrt(jnp.asarray(in1, jnp.float32))
    bound2 = 1.0 / jnp.sqrt(jnp.asarray(h, jnp.float32))
    # stored as [in, out] (transposed relative to PyTorch's [out, in])
    w1 = jax.random.uniform(k1, (in1, h), jnp.float32, -bound1, bound1)
    b1 = jax.random.uniform(k2, (h,), jnp.float32, -bound1, bound1)
    w2 = jax.random.uniform(k3, (h, out), jnp.float32, -bound2, bound2)
    b2 = jax.random.uniform(k4, (out,), jnp.float32, -bound2, bound2)
    return w1, b1, w2, b2


def _reference(x, w1, b1, w2, b2):
    return jnp.maximum(x @ w1 + b1, 0.0) @ w2 + b2


if __name__ == "__main__":
    key = jax.random.PRNGKey(0)
    pkey, xkey, xkey2 = jax.random.split(key, 3)

    w1, b1, w2, b2 = init_params(pkey)

    # Small-batch check (single grid step).
    x = jax.random.normal(xkey, (8, 10), jnp.float32)
    y = jax.block_until_ready(toy_model_forward(x, w1, b1, w2, b2))
    ref = _reference(x, w1, b1, w2, b2)
    assert y.shape == (8, 5)
    assert jnp.allclose(y, ref, atol=1e-5, rtol=1e-5)

    # Larger-batch check (exercises the batch grid + padding path).
    x2 = jax.random.normal(xkey2, (384, 10), jnp.float32)
    y2 = jax.block_until_ready(toy_model_forward(x2, w1, b1, w2, b2))
    ref2 = _reference(x2, w1, b1, w2, b2)
    assert y2.shape == (384, 5)
    assert jnp.allclose(y2, ref2, atol=1e-5, rtol=1e-5)

    print("KERNEL_OK")
</pallas_src>

<mosaic_0001>
module attributes {stable_mosaic.version = 11 : i64} {
  func.func @toy_mlp_kernel(%arg0: i32, %arg1: memref<8x128xf32, #tpu.memory_space<vmem>>, %arg2: memref<128x128xf32, #tpu.memory_space<vmem>>, %arg3: memref<128x128xf32, #tpu.memory_space<vmem>>, %arg4: memref<8x128xf32, #tpu.memory_space<vmem>>) attributes {dimension_semantics = [#tpu.dimension_semantics<parallel>], iteration_bounds = array<i64: 1>, scalar_prefetch = 0 : i64, scratch_operands = 0 : i64, tpu.core_type = #tpu.core_type<tc>, window_params = [{transform_indices = @transform_0, window_bounds = array<i64: 8, 128>}, {pipeline_mode = #tpu.pipeline_mode<synchronous>, transform_indices = @transform_1, window_bounds = array<i64: 128, 128>}, {pipeline_mode = #tpu.pipeline_mode<synchronous>, transform_indices = @transform_2, window_bounds = array<i64: 128, 128>}, {transform_indices = @transform_3, window_bounds = array<i64: 8, 128>}]} {
    %c0 = arith.constant 0 : index
    %c0_0 = arith.constant 0 : index
    %0 = vector.load %arg1[%c0, %c0_0] : memref<8x128xf32, #tpu.memory_space<vmem>>, vector<8x128xf32>
    %c0_1 = arith.constant 0 : index
    %c0_2 = arith.constant 0 : index
    %1 = vector.load %arg2[%c0_1, %c0_2] : memref<128x128xf32, #tpu.memory_space<vmem>>, vector<128x128xf32>
    %cst = arith.constant dense<0.000000e+00> : vector<8x128xf32>
    %2 = tpu.matmul %0, %1, %cst {dimension_numbers = #tpu.dot_dimension_numbers<[1], [0], [0], [1], [0, 0, 1, 1], [], []>} : vector<8x128xf32>, vector<128x128xf32>, vector<8x128xf32> -> vector<8x128xf32>
    %cst_3 = arith.constant 0.000000e+00 : f32
    %3 = vector.broadcast %cst_3 : f32 to vector<8x128xf32>
    %4 = arith.maximumf %2, %3 : vector<8x128xf32>
    %c0_4 = arith.constant 0 : index
    %c0_5 = arith.constant 0 : index
    %5 = vector.load %arg3[%c0_4, %c0_5] : memref<128x128xf32, #tpu.memory_space<vmem>>, vector<128x128xf32>
    %cst_6 = arith.constant dense<0.000000e+00> : vector<8x128xf32>
    %6 = tpu.matmul %4, %5, %cst_6 {dimension_numbers = #tpu.dot_dimension_numbers<[1], [0], [0], [1], [0, 0, 1, 1], [], []>} : vector<8x128xf32>, vector<128x128xf32>, vector<8x128xf32> -> vector<8x128xf32>
    %c0_7 = arith.constant 0 : index
    %c0_8 = arith.constant 0 : index
    %7 = vector.load %arg4[%c0_7, %c0_8] : memref<8x128xf32, #tpu.memory_space<vmem>>, vector<8x128xf32>
    tpu.vector_store %arg4[%c0_7, %c0_8], %6 {strides = array<i32>} : memref<8x128xf32, #tpu.memory_space<vmem>>, vector<8x128xf32>,
    return
  }
  func.func @transform_0(%arg0: i32) -> (i32, i32) {
    %c0_i32 = arith.constant 0 : i32
    %c0_i32_0 = arith.constant 0 : i32
    return %arg0, %c0_i32 : i32, i32
  }
  func.func @transform_1(%arg0: i32) -> (i32, i32) {
    %c0_i32 = arith.constant 0 : i32
    %c0_i32_0 = arith.constant 0 : i32
    %c0_i32_1 = arith.constant 0 : i32
    return %c0_i32, %c0_i32_0 : i32, i32
  }
  func.func @transform_2(%arg0: i32) -> (i32, i32) {
    %c0_i32 = arith.constant 0 : i32
    %c0_i32_0 = arith.constant 0 : i32
    %c0_i32_1 = arith.constant 0 : i32
    return %c0_i32, %c0_i32_0 : i32, i32
  }
  func.func @transform_3(%arg0: i32) -> (i32, i32) {
    %c0_i32 = arith.constant 0 : i32
    %c0_i32_0 = arith.constant 0 : i32
    return %arg0, %c0_i32 : i32, i32
  }
}

</mosaic_0001>

<llo_original>
// kernel: toy_model_forward.1
$region0: #{toy_model_forward.1}
  #allocation0 [shape = 'u32[]', space=smem, size = 0x4, offset = 0x4, fixed_abs, tag = 'smem constant byte address 0x4 - core index']
  #allocation1 [shape = 'u32[144,128]{1,0:T(1,128)}', space=vmem, size = 0x12000, scoped, tag = 'internal scratch']
  %s0 = inlined_call_operand.vmem [shape: f32[8,128], index: 0, kind: input, shape index: {}]
  %s1 = inlined_call_operand.vmem [shape: f32[128,128], index: 1, kind: input, shape index: {}]
  %s2 = inlined_call_operand.vmem [shape: f32[128,128], index: 2, kind: input, shape index: {}]
  %s3 = inlined_call_operand.hbm [shape: f32[8,128], index: 3, kind: output, shape index: {}]
  %s4 = sld [smem:[#allocation0]]
  $region22: #{toy_model_forward.1} parent=0
    _
  %s6 = ssub.s32 1, %s4
  %s7 = scalar_select 0, %s6, %s4
  $region1: #{toy_model_forward.1} parent=0
    #allocation2 [shape = 'u8[4096]{0}', space=vmem, size = 0x1000, scoped, tag = 'output window, operand 0, single buffered']
    #allocation3 [shape = 's32[1]{0}', space=sflag, size = 0x4, scoped, tag = 'scoped memory for toy_model_forward.1']
    %8 = vsyncpa [#allocation3], 0
    // Predicated region
    $region2: #{toy_model_forward.1} parent=1 // pred_check
      _
    $region3: #{toy_model_forward.1} parent=1 // pred_check_branch
      %10 = sbr.rel (0) target = $region5
    $region4: #{toy_model_forward.1} parent=1 // pred_region
      _
    $region5: #{toy_model_forward.1} parent=1 // pred_fallthru
      _
    // Predicated region
    $region6: #{toy_model_forward.1} parent=1 // pred_check
      _
    $region7: #{toy_model_forward.1} parent=1 // pred_check_branch
      %12 = sbr.rel (0) target = $region9
    $region8: #{toy_model_forward.1} parent=1 // pred_region
      _
    $region9: #{toy_model_forward.1} parent=1 // pred_fallthru
      _
    // Predicated region
    $region10: #{toy_model_forward.1} parent=1 // pred_check
      _
    $region11: #{toy_model_forward.1} parent=1 // pred_check_branch
      %14 = sbr.rel (0) target = $region13
    $region12: #{toy_model_forward.1} parent=1 // pred_region
      _
    $region13: #{toy_model_forward.1} parent=1 // pred_fallthru
      _
    %v15 = vld [vmem:[%s0] sm:$0xff]
    %v16 = vld [vmem:[%s1] sm:$0xff]
    %v17 = vld [vmem:[%s1 + $0x8] sm:$0xff]
    %v18 = vld [vmem:[%s1 + $0x10] sm:$0xff]
    %v19 = vld [vmem:[%s1 + $0x18] sm:$0xff]
    %v20 = vld [vmem:[%s1 + $0x20] sm:$0xff]
    %v21 = vld [vmem:[%s1 + $0x28] sm:$0xff]
    %v22 = vld [vmem:[%s1 + $0x30] sm:$0xff]
    %v23 = vld [vmem:[%s1 + $0x38] sm:$0xff]
    %v24 = vld [vmem:[%s1 + $0x40] sm:$0xff]
    %v25 = vld [vmem:[%s1 + $0x48] sm:$0xff]
    %v26 = vld [vmem:[%s1 + $0x50] sm:$0xff]
    %v27 = vld [vmem:[%s1 + $0x58] sm:$0xff]
    %v28 = vld [vmem:[%s1 + $0x60] sm:$0xff]
    %v29 = vld [vmem:[%s1 + $0x68] sm:$0xff]
    %v30 = vld [vmem:[%s1 + $0x70] sm:$0xff]
    %v31 = vld [vmem:[%s1 + $0x78] sm:$0xff]
    %32 = vmatprep.subr.mxu0 0.0
    %33 = vmatpush1.msra.mxu0 %v16
    %34 = vmatprep.subr.mxu0 0.0
    %35 = vmatpush1.msra.mxu0 %v17
    %36 = vmatprep.subr.mxu0 0.0
    %37 = vmatpush1.msra.mxu0 %v18
    %38 = vmatprep.subr.mxu0 0.0
    %39 = vmatpush1.msra.mxu0 %v19
    %40 = vmatprep.subr.mxu0 0.0
    %41 = vmatpush1.msra.mxu0 %v20
    %42 = vmatprep.subr.mxu0 0.0
    %43 = vmatpush1.msra.mxu0 %v21
    %44 = vmatprep.subr.mxu0 0.0
    %45 = vmatpush1.msra.mxu0 %v22
    %46 = vmatprep.subr.mxu0 0.0
    %47 = vmatpush1.msra.mxu0 %v23
    %48 = vmatprep.subr.mxu0 0.0
    %49 = vmatpush1.msra.mxu0 %v24
    %50 = vmatprep.subr.mxu0 0.0
    %51 = vmatpush1.msra.mxu0 %v25
    %52 = vmatprep.subr.mxu0 0.0
    %53 = vmatpush1.msra.mxu0 %v26
    %54 = vmatprep.subr.mxu0 0.0
    %55 = vmatpush1.msra.mxu0 %v27
    %56 = vmatprep.subr.mxu0 0.0
    %57 = vmatpush1.msra.mxu0 %v28
    %58 = vmatprep.subr.mxu0 0.0
    %59 = vmatpush1.msra.mxu0 %v29
    %60 = vmatprep.subr.mxu0 0.0
    %61 = vmatpush1.msra.mxu0 %v30
    %62 = vmatprep.subr.mxu0 0.0
    %63 = vmatpush1.msra.mxu0 %v31
    %64 = vmatprep.subr.mxu0 0.0
    %65 = vmatpush1.msra.mxu0 0.0
    %66 = vmatprep.subr.mxu0 0.0
    %67 = vmatpush1.msra.mxu0 0.0
    %68 = vmatprep.subr.mxu0 0.0
    %69 = vmatpush1.msra.mxu0 0.0
    %70 = vmatprep.subr.mxu0 0.0
    %71 = vmatpush1.msra.mxu0 0.0
    %72 = vmatprep.subr.mxu0 0.0
    %73 = vmatpush1.msra.mxu0 0.0
    %74 = vmatprep.subr.mxu0 0.0
    %75 = vmatpush1.msra.mxu0 0.0
    %76 = vmatprep.subr.mxu0 0.0
    %77 = vmatpush1.msra.mxu0 0.0
    %78 = vmatprep.subr.mxu0 0.0
    %79 = vmatpush1.msra.mxu0 0.0
    %80 = vmatprep.subr.mxu0 0.0
    %81 = vmatpush1.msra.mxu0 0.0
    %82 = vmatprep.subr.mxu0 0.0
    %83 = vmatpush1.msra.mxu0 0.0
    %84 = vmatprep.subr.mxu0 0.0
    %85 = vmatpush1.msra.mxu0 0.0
    %86 = vmatprep.subr.mxu0 0.0
    %87 = vmatpush1.msra.mxu0 0.0
    %88 = vmatprep.subr.mxu0 0.0
    %89 = vmatpush1.msra.mxu0 0.0
    %90 = vmatprep.subr.mxu0 0.0
    %91 = vmatpush1.msra.mxu0 0.0
    %92 = vmatprep.subr.mxu0 0.0
    %93 = vmatpush1.msra.mxu0 0.0
    %94 = vmatprep.subr.mxu0 0.0
    %95 = vmatpush1.msra.mxu0 0.0
    %96 = vmatprep.mubr.f32.mxu0 0.0
    %97 = vmatmul.mubr.f32.gmra.mrb[0].mxu0 %v15
    %v98 = vpop.f32.mrb[0].mxu0
    %v99 = vadd.f32 0.0, %v98
    %v100 = vpop.f32.mrb[0].mxu0
    %101 = vdwg.mxu0
    %v102 = vmax.f32 %v99, 0.0
    %v103 = vld [vmem:[%s2] sm:$0xff]
    %v104 = vld [vmem:[%s2 + $0x8] sm:$0xff]
    %v105 = vld [vmem:[%s2 + $0x10] sm:$0xff]
    %v106 = vld [vmem:[%s2 + $0x18] sm:$0xff]
    %v107 = vld [vmem:[%s2 + $0x20] sm:$0xff]
    %v108 = vld [vmem:[%s2 + $0x28] sm:$0xff]
    %v109 = vld [vmem:[%s2 + $0x30] sm:$0xff]
    %v110 = vld [vmem:[%s2 + $0x38] sm:$0xff]
    %v111 = vld [vmem:[%s2 + $0x40] sm:$0xff]
    %v112 = vld [vmem:[%s2 + $0x48] sm:$0xff]
    %v113 = vld [vmem:[%s2 + $0x50] sm:$0xff]
    %v114 = vld [vmem:[%s2 + $0x58] sm:$0xff]
    %v115 = vld [vmem:[%s2 + $0x60] sm:$0xff]
    %v116 = vld [vmem:[%s2 + $0x68] sm:$0xff]
    %v117 = vld [vmem:[%s2 + $0x70] sm:$0xff]
    %v118 = vld [vmem:[%s2 + $0x78] sm:$0xff]
    %119 = vmatprep.subr.mxu0 0.0
    %120 = vmatpush1.msra.mxu0 %v103
    %121 = vmatprep.subr.mxu0 0.0
    %122 = vmatpush1.msra.mxu0 %v104
    %123 = vmatprep.subr.mxu0 0.0
    %124 = vmatpush1.msra.mxu0 %v105
    %125 = vmatprep.subr.mxu0 0.0
    %126 = vmatpush1.msra.mxu0 %v106
    %127 = vmatprep.subr.mxu0 0.0
    %128 = vmatpush1.msra.mxu0 %v107
    %129 = vmatprep.subr.mxu0 0.0
    %130 = vmatpush1.msra.mxu0 %v108
    %131 = vmatprep.subr.mxu0 0.0
    %132 = vmatpush1.msra.mxu0 %v109
    %133 = vmatprep.subr.mxu0 0.0
    %134 = vmatpush1.msra.mxu0 %v110
    %135 = vmatprep.subr.mxu0 0.0
    %136 = vmatpush1.msra.mxu0 %v111
    %137 = vmatprep.subr.mxu0 0.0
    %138 = vmatpush1.msra.mxu0 %v112
    %139 = vmatprep.subr.mxu0 0.0
    %140 = vmatpush1.msra.mxu0 %v113
    %141 = vmatprep.subr.mxu0 0.0
    %142 = vmatpush1.msra.mxu0 %v114
    %143 = vmatprep.subr.mxu0 0.0
    %144 = vmatpush1.msra.mxu0 %v115
    %145 = vmatprep.subr.mxu0 0.0
    %146 = vmatpush1.msra.mxu0 %v116
    %147 = vmatprep.subr.mxu0 0.0
    %148 = vmatpush1.msra.mxu0 %v117
    %149 = vmatprep.subr.mxu0 0.0
    %150 = vmatpush1.msra.mxu0 %v118
    %151 = vmatprep.subr.mxu0 0.0
    %152 = vmatpush1.msra.mxu0 0.0
    %153 = vmatprep.subr.mxu0 0.0
    %154 = vmatpush1.msra.mxu0 0.0
    %155 = vmatprep.subr.mxu0 0.0
    %156 = vmatpush1.msra.mxu0 0.0
    %157 = vmatprep.subr.mxu0 0.0
    %158 = vmatpush1.msra.mxu0 0.0
    %159 = vmatprep.subr.mxu0 0.0
    %160 = vmatpush1.msra.mxu0 0.0
    %161 = vmatprep.subr.mxu0 0.0
    %162 = vmatpush1.msra.mxu0 0.0
    %163 = vmatprep.subr.mxu0 0.0
    %164 = vmatpush1.msra.mxu0 0.0
    %165 = vmatprep.subr.mxu0 0.0
    %166 = vmatpush1.msra.mxu0 0.0
    %167 = vmatprep.subr.mxu0 0.0
    %168 = vmatpush1.msra.mxu0 0.0
    %169 = vmatprep.subr.mxu0 0.0
    %170 = vmatpush1.msra.mxu0 0.0
    %171 = vmatprep.subr.mxu0 0.0
    %172 = vmatpush1.msra.mxu0 0.0
    %173 = vmatprep.subr.mxu0 0.0
    %174 = vmatpush1.msra.mxu0 0.0
    %175 = vmatprep.subr.mxu0 0.0
    %176 = vmatpush1.msra.mxu0 0.0
    %177 = vmatprep.subr.mxu0 0.0
    %178 = vmatpush1.msra.mxu0 0.0
    %179 = vmatprep.subr.mxu0 0.0
    %180 = vmatpush1.msra.mxu0 0.0
    %181 = vmatprep.subr.mxu0 0.0
    %182 = vmatpush1.msra.mxu0 0.0
    %183 = vmatprep.mubr.f32.mxu0 0.0
    %184 = vmatmul.mubr.f32.gmra.mrb[0].mxu0 %v102
    %v185 = vpop.f32.mrb[0].mxu0
    %v186 = vadd.f32 0.0, %v185
    %v187 = vpop.f32.mrb[0].mxu0
    %188 = vdwg.mxu0
    %189 = vst [vmem:[#allocation2] sm:$0xff] %v186
    // Predicated region
    $region14: #{toy_model_forward.1} parent=1 // pred_check
      _
    $region15: #{toy_model_forward.1} parent=1 // pred_check_branch
      %191 = sbr.rel (0) target = $region17
    $region16: #{toy_model_forward.1} parent=1 // pred_region
      %s193 = ssub.s32 128, 128
      %194 = vsyncadd [#allocation3], %s193
      %s196 = sshll.u32 [#allocation2], 4
      %s197 = int_to_ptr.vmem [resolvable:$true] %s196
      %199 = dma.vmem_to_hbm [thread:$0]  %s197, 128, %s3, [#allocation3]
    $region17: #{toy_model_forward.1} parent=1 // pred_fallthru
      _
    // Predicated region
    $region18: #{toy_model_forward.1} parent=1 // pred_check
      _
    $region19: #{toy_model_forward.1} parent=1 // pred_check_branch
      %201 = sbr.rel (0) target = $region21
    $region20: #{toy_model_forward.1} parent=1 // pred_region
      %202 = dma.done [#allocation3], 128
    $region21: #{toy_model_forward.1} parent=1 // pred_fallthru
      _
    %203 = vsyncpa [#allocation3], 1

</llo_original>
